<compile_context>
chip_gen: v7x
topology: tpu7x:2x2x1
jax: 0.10.0
libtpu: 0.0.40
codegen_flags: <defaults>
</compile_context>

<pallas_src>
import functools

import jax
import jax.numpy as jnp
from jax.experimental import pallas as pl
from jax.experimental.pallas import tpu as pltpu

LANE = 128
SUBLANE = 8
F32 = 4                       # bytes per float32
_STEP_OVERHEAD_BYTES = 450_000  # ~0.35 us per grid step expressed in HBM bytes


def _round_up(n, m):
    return ((n + m - 1) // m) * m


# --------------------------------------------------------------------------------------
# Kernel
# --------------------------------------------------------------------------------------

def _layernorm_rows(x, a2, b2, *, d_true, pad_d, eps, approx_recip):
    """Torch-style LayerNorm on an f32 (rows, Dp) tile.

    Lanes >= d_true hold exact zeros, so `centered` equals -mean there and each padded
    lane contributes mean^2 to the squared sum; that contribution is removed with an
    analytic per-row scalar fixup instead of a per-tile iota/select mask.
    """
    mean = jnp.sum(x, axis=-1, keepdims=True) * (1.0 / d_true)
    centered = x - mean
    sq_sum = jnp.sum(centered * centered, axis=-1, keepdims=True)
    if pad_d:
        sq_sum = sq_sum - float(pad_d) * (mean * mean)
    var = sq_sum * (1.0 / max(d_true - 1, 1))      # unbiased, matches torch .std()
    std = jnp.sqrt(var)
    inv = pl.reciprocal(std + eps, approx=approx_recip)   # EUP slot, not a VALU divide chain
    # a2 / b2 are zero in the padded lanes, so the result stays exactly zero there.
    return a2 * (centered * inv) + b2


def _fused_decoder_kernel(x_ref, w_ref, bias_ref, a2_ref, b2_ref, a2f_ref, b2f_ref,
                          o_ref, acc_ref, *, weights_resident, d_true, pad_d, eps,
                          mxu_dtype, approx_recip):
    """grid = (row_tiles, n_layers).  The residual row tile lives in the VMEM scratch
    `acc_ref` across the sequential layer axis; the final LayerNorm is fused into the
    last layer step, so the residual stream touches HBM exactly once in and once out."""
    l = pl.program_id(1)
    n_layers = pl.num_programs(1)

    @pl.when(l == 0)
    def _load_residual():
        acc_ref[...] = x_ref[...].astype(jnp.float32)

    x = acc_ref[...]
    normed = _layernorm_rows(x, a2_ref[l], b2_ref[l], d_true=d_true, pad_d=pad_d,
                             eps=eps, approx_recip=approx_recip)
    w = w_ref[l] if weights_resident else w_ref[...]
    sub = jnp.dot(normed.astype(mxu_dtype), w, preferred_element_type=jnp.float32)
    # Eval-mode dropout == identity; residual add stays in f32.
    acc_ref[...] = x + (sub + bias_ref[l])

    @pl.when(l == n_layers - 1)
    def _final_norm():
        o_ref[...] = _layernorm_rows(acc_ref[...], a2f_ref[...], b2f_ref[...],
                                     d_true=d_true, pad_d=pad_d, eps=eps,
                                     approx_recip=approx_recip).astype(o_ref.dtype)


# --------------------------------------------------------------------------------------
# Planning (tile size / weight residency / VMEM budget)
# --------------------------------------------------------------------------------------

def _vmem_ceiling():
    """Per-generation VMEM ceiling with ~1/8 headroom for compiler scratch
    (≈56 MiB on v7x's 64 MiB, ≈112 MiB on v5e/v6e's 128 MiB)."""
    cap = 64 << 20  # conservative default if the query is unavailable
    try:
        info = pltpu.get_tpu_info()
        for name in ("vmem_capacity_bytes", "vmem_size_bytes", "vmem_bytes"):
            v = getattr(info, name, None)
            if v:
                cap = int(v)
                break
    except Exception:
        pass
    return cap - max(cap // 8, 4 << 20)


def _vmem_est(br, dp, n_layers, w_bytes, weights_resident):
    x_io = 4 * br * dp * F32                 # double-buffered input + output row tiles
    acc = br * dp * F32                      # residual scratch
    temps = 4 * br * dp * F32                # in-kernel temporaries (centered/normed/sub/...)
    w_bufs = (2 * n_layers) if weights_resident else 2   # default 2x pipeline buffering
    w = w_bufs * dp * dp * w_bytes
    vecs = 2 * (3 * n_layers + 2) * SUBLANE * dp * F32
    return x_io + acc + temps + w + vecs + (2 << 20)


def _plan(rows, dp, n_layers, w_bytes, ceiling, block_rows=None, force_resident=None):
    """Pick (block_rows, weights_resident, vmem_needed) minimizing an HBM-byte cost
    model (residual traffic + weight (re)streaming + per-grid-step overhead),
    subject to the VMEM ceiling."""
    rows8 = _round_up(rows, SUBLANE)
    if block_rows is not None:
        cands = (min(_round_up(int(block_rows), SUBLANE), rows8),)
    else:
        cands = (1024, 768, 512, 384, 256, 192, 128, 96, 64, 48, 32, 16, 8)
    modes = (True, False) if force_resident is None else (bool(force_resident),)

    best = None  # (cost, br, resident, need)
    for cand in cands:
        br = min(_round_up(cand, SUBLANE), rows8)
        rows_p = _round_up(rows8, br)
        n_tiles = rows_p // br
        for resident in modes:
            need = _vmem_est(br, dp, n_layers, w_bytes, resident)
            if need > ceiling:
                continue
            w_traffic = (n_layers if resident else n_tiles * n_layers) * dp * dp * w_bytes
            cost = 8 * rows_p * dp + w_traffic + n_tiles * n_layers * _STEP_OVERHEAD_BYTES
            if best is None or cost < best[0]:
                best = (cost, br, resident, need)

    if best is None:
        # TODO(synk): K-tile the (Dp, Dp) weight with an f32 accumulator scratch when even
        # one streamed weight tile does not fit the VMEM ceiling.
        br = min(SUBLANE, rows8)
        resident = False if force_resident is None else bool(force_resident)
        return br, resident, _vmem_est(br, dp, n_layers, w_bytes, resident)
    return best[1], best[2], best[3]


# --------------------------------------------------------------------------------------
# Wrapper
# --------------------------------------------------------------------------------------

def decoder_forward(x, layer_params, norm_a2, norm_b2, *, eps=1e-6,
                    mxu_dtype=jnp.bfloat16, block_rows=None, weights_resident=None):
    """Decoder.forward.

    x: (B, S, D).  layer_params: list of (w (D,D), bias (D,), a2 (D,), b2 (D,)),
    one tuple per decoder layer (the Linear stands in for the generic layer).
    norm_a2 / norm_b2: (D,) final LayerNorm parameters.
    mxu_dtype: matmul input dtype (bf16 default on all generations; f32 for exactness).
    """
    B, S, D = x.shape
    n_layers = len(layer_params)
    assert n_layers >= 1, "Decoder needs at least one layer"
    rows = B * S

    dp = _round_up(D, LANE)            # lane-dense feature dim
    pad_d = dp - D
    w_bytes = jnp.dtype(mxu_dtype).itemsize

    ceiling = _vmem_ceiling()
    br, resident, vmem_needed = _plan(rows, dp, n_layers, w_bytes, ceiling,
                                      block_rows=block_rows, force_resident=weights_resident)
    rows_p = _round_up(_round_up(rows, SUBLANE), br)
    n_tiles = rows_p // br

    # Pre-pad & cast all parameters ONCE (no per-layer XLA pad/cast ops).
    w_all = jnp.stack([jnp.asarray(p[0], jnp.float32) for p in layer_params])       # (L, D, D)
    wp = jnp.pad(w_all, ((0, 0), (0, pad_d), (0, pad_d))).astype(mxu_dtype)          # (L, Dp, Dp)

    def _stack_vecs(idx):
        v = jnp.stack([jnp.asarray(p[idx], jnp.float32) for p in layer_params])      # (L, D)
        return jnp.pad(v, ((0, 0), (0, pad_d)))[:, None, :]                          # (L, 1, Dp)

    biasp, a2p, b2p = _stack_vecs(1), _stack_vecs(2), _stack_vecs(3)
    a2f = jnp.pad(jnp.asarray(norm_a2, jnp.float32), (0, pad_d)).reshape(1, dp)
    b2f = jnp.pad(jnp.asarray(norm_b2, jnp.float32), (0, pad_d)).reshape(1, dp)

    x2d = jnp.pad(jnp.asarray(x, jnp.float32).reshape(rows, D),
                  ((0, rows_p - rows), (0, pad_d)))

    if resident:
        # All L weights resident in VMEM across the whole grid (constant block index).
        w_spec = pl.BlockSpec((n_layers, dp, dp), lambda i, l: (0, 0, 0))
    else:
        # Stream one (Dp, Dp) weight per layer step (double-buffered by the pipeline).
        w_spec = pl.BlockSpec((None, dp, dp), lambda i, l: (l, 0, 0))

    kernel = functools.partial(
        _fused_decoder_kernel,
        weights_resident=resident, d_true=D, pad_d=pad_d, eps=eps,
        mxu_dtype=mxu_dtype,
        approx_recip=(jnp.dtype(mxu_dtype) != jnp.dtype(jnp.float32)))

    w_traffic = (n_layers if resident else n_tiles * n_layers) * dp * dp * w_bytes
    out2d = pl.pallas_call(
        kernel,
        out_shape=jax.ShapeDtypeStruct((rows_p, dp), jnp.float32),
        grid=(n_tiles, n_layers),
        in_specs=[
            pl.BlockSpec((br, dp), lambda i, l: (i, 0)),               # residual input row tile
            w_spec,                                                    # layer weights
            pl.BlockSpec((n_layers, 1, dp), lambda i, l: (0, 0, 0)),   # per-layer linear bias
            pl.BlockSpec((n_layers, 1, dp), lambda i, l: (0, 0, 0)),   # per-layer LN gain a2
            pl.BlockSpec((n_layers, 1, dp), lambda i, l: (0, 0, 0)),   # per-layer LN bias b2
            pl.BlockSpec((1, dp), lambda i, l: (0, 0)),                # final LN gain
            pl.BlockSpec((1, dp), lambda i, l: (0, 0)),                # final LN bias
        ],
        out_specs=pl.BlockSpec((br, dp), lambda i, l: (i, 0)),         # resident across layer axis
        scratch_shapes=[pltpu.VMEM((br, dp), jnp.float32)],            # residual accumulator
        compiler_params=pltpu.CompilerParams(
            dimension_semantics=("parallel", "arbitrary"),
            vmem_limit_bytes=int(min(max(vmem_needed, 32 << 20), ceiling)),
        ),
        cost_estimate=pl.CostEstimate(
            flops=2 * rows_p * dp * dp * n_layers + 10 * rows_p * dp * (n_layers + 1),
            transcendentals=2 * rows_p * (n_layers + 1),
            bytes_accessed=8 * rows_p * dp + w_traffic + (3 * n_layers + 2) * dp * F32,
        ),
    )(x2d, wp, biasp, a2p, b2p, a2f, b2f)

    return out2d[:rows, :D].reshape(B, S, D)


# --------------------------------------------------------------------------------------
# Reference + test
# --------------------------------------------------------------------------------------

def _reference_decoder(x, layer_params, norm_a2, norm_b2, eps=1e-6):
    """Pure-JAX reference mirroring the PyTorch module (eval-mode dropout)."""
    def ln(y, a2, b2):
        mean = jnp.mean(y, axis=-1, keepdims=True)
        var = jnp.sum((y - mean) ** 2, axis=-1, keepdims=True) / (y.shape[-1] - 1)
        std = jnp.sqrt(var)
        return a2 * (y - mean) / (std + eps) + b2

    y = x.astype(jnp.float32)
    for (w, bias, a2, b2) in layer_params:
        y = y + (ln(y, a2, b2) @ w + bias)
    return ln(y, norm_a2, norm_b2)


if __name__ == "__main__":
    key = jax.random.PRNGKey(0)
    batch, seq, size, n_layers = 2, 8, 32, 2

    keys = jax.random.split(key, 1 + 2 * n_layers)
    x = jax.random.normal(keys[0], (batch, seq, size), dtype=jnp.float32)

    # Deterministic synthetic parameters (not a checkpoint load).
    layer_params = []
    for li in range(n_layers):
        w = jax.random.normal(keys[1 + 2 * li], (size, size), dtype=jnp.float32) * 0.02
        bias = jax.random.normal(keys[2 + 2 * li], (size,), dtype=jnp.float32) * 0.01
        a2 = jnp.ones((size,), dtype=jnp.float32)   # LayerNorm gain (torch init)
        b2 = jnp.zeros((size,), dtype=jnp.float32)  # LayerNorm bias (torch init)
        layer_params.append((w, bias, a2, b2))
    norm_a2 = jnp.ones((size,), dtype=jnp.float32)
    norm_b2 = jnp.zeros((size,), dtype=jnp.float32)

    ref = _reference_decoder(x, layer_params, norm_a2, norm_b2)

    # f32 MXU path: strict check against the torch-style reference.
    out_f32 = decoder_forward(x, layer_params, norm_a2, norm_b2, mxu_dtype=jnp.float32)
    out_f32 = jax.block_until_ready(out_f32)
    assert out_f32.shape == (batch, seq, size)
    assert jnp.allclose(out_f32, ref, atol=1e-4, rtol=1e-4), "f32 path mismatch vs reference"

    # bf16 MXU path (default on all generations): looser tolerance.
    out_bf16 = decoder_forward(x, layer_params, norm_a2, norm_b2, mxu_dtype=jnp.bfloat16)
    out_bf16 = jax.block_until_ready(out_bf16)
    assert out_bf16.shape == (batch, seq, size)
    assert jnp.allclose(out_bf16, ref, atol=1e-2, rtol=1e-2), "bf16 path mismatch vs reference"

    # Exercise the streamed-weight (non-resident) code path as well.
    out_stream = decoder_forward(x, layer_params, norm_a2, norm_b2,
                                 mxu_dtype=jnp.bfloat16, weights_resident=False)
    out_stream = jax.block_until_ready(out_stream)
    assert jnp.allclose(out_stream, ref, atol=1e-2, rtol=1e-2), "streamed-weight path mismatch"

    print("KERNEL_OK")
</pallas_src>

<mosaic_0001>
module attributes {stable_mosaic.version = 11 : i64} {
  func.func @_fused_decoder_kernel(%arg0: i32, %arg1: i32, %arg2: memref<16x128xf32, #tpu.memory_space<vmem>>, %arg3: memref<2x128x128xf32, #tpu.memory_space<vmem>>, %arg4: memref<2x1x128xf32, #tpu.memory_space<vmem>>, %arg5: memref<2x1x128xf32, #tpu.memory_space<vmem>>, %arg6: memref<2x1x128xf32, #tpu.memory_space<vmem>>, %arg7: memref<1x128xf32, #tpu.memory_space<vmem>>, %arg8: memref<1x128xf32, #tpu.memory_space<vmem>>, %arg9: memref<16x128xf32, #tpu.memory_space<vmem>>, %arg10: memref<16x128xf32, #tpu.memory_space<vmem>>) attributes {dimension_semantics = [#tpu.dimension_semantics<parallel>, #tpu.dimension_semantics<arbitrary>], iteration_bounds = array<i64: 1, 2>, scalar_prefetch = 0 : i64, scratch_operands = 1 : i64, tpu.core_type = #tpu.core_type<tc>, window_params = [{transform_indices = @transform_0, window_bounds = array<i64: 16, 128>}, {pipeline_mode = #tpu.pipeline_mode<synchronous>, transform_indices = @transform_1, window_bounds = array<i64: 2, 128, 128>}, {pipeline_mode = #tpu.pipeline_mode<synchronous>, transform_indices = @transform_2, window_bounds = array<i64: 2, 1, 128>}, {pipeline_mode = #tpu.pipeline_mode<synchronous>, transform_indices = @transform_3, window_bounds = array<i64: 2, 1, 128>}, {pipeline_mode = #tpu.pipeline_mode<synchronous>, transform_indices = @transform_4, window_bounds = array<i64: 2, 1, 128>}, {pipeline_mode = #tpu.pipeline_mode<synchronous>, transform_indices = @transform_5, window_bounds = array<i64: 1, 128>}, {pipeline_mode = #tpu.pipeline_mode<synchronous>, transform_indices = @transform_6, window_bounds = array<i64: 1, 128>}, {transform_indices = @transform_7, window_bounds = array<i64: 16, 128>}]} {
    %c0_i32 = arith.constant 0 : i32
    %0 = arith.cmpi eq, %arg1, %c0_i32 : i32
    %1 = arith.extui %0 : i1 to i32
    %c0_i32_0 = arith.constant 0 : i32
    %2 = arith.cmpi ne, %1, %c0_i32_0 : i32
    scf.if %2 {
      %c0_19 = arith.constant 0 : index
      %c0_20 = arith.constant 0 : index
      %49 = vector.load %arg2[%c0_19, %c0_20] : memref<16x128xf32, #tpu.memory_space<vmem>>, vector<16x128xf32>
      %c0_21 = arith.constant 0 : index
      %c0_22 = arith.constant 0 : index
      %50 = vector.load %arg10[%c0_21, %c0_22] : memref<16x128xf32, #tpu.memory_space<vmem>>, vector<16x128xf32>
      tpu.vector_store %arg10[%c0_21, %c0_22], %49 {strides = array<i32>} : memref<16x128xf32, #tpu.memory_space<vmem>>, vector<16x128xf32>,
    } else {
    }
    %c0 = arith.constant 0 : index
    %c0_1 = arith.constant 0 : index
    %3 = vector.load %arg10[%c0, %c0_1] : memref<16x128xf32, #tpu.memory_space<vmem>>, vector<16x128xf32>
    %4 = arith.index_cast %arg1 : i32 to index
    %c0_2 = arith.constant 0 : index
    %c0_3 = arith.constant 0 : index
    %5 = vector.load %arg5[%4, %c0_2, %c0_3] : memref<2x1x128xf32, #tpu.memory_space<vmem>>, vector<1x1x128xf32>
    %6 = vector.shape_cast %5 : vector<1x1x128xf32> to vector<1x128xf32>
    %7 = arith.index_cast %arg1 : i32 to index
    %c0_4 = arith.constant 0 : index
    %c0_5 = arith.constant 0 : index
    %8 = vector.load %arg6[%7, %c0_4, %c0_5] : memref<2x1x128xf32, #tpu.memory_space<vmem>>, vector<1x1x128xf32>
    %9 = vector.shape_cast %8 : vector<1x1x128xf32> to vector<1x128xf32>
    %cst = arith.constant dense<0.000000e+00> : vector<16xf32>
    %10 = vector.multi_reduction <add>, %3, %cst [1] : vector<16x128xf32> to vector<16xf32>
    %11 = vector.shape_cast %10 : vector<16xf32> to vector<16x1xf32>
    %cst_6 = arith.constant 3.125000e-02 : f32
    %12 = vector.broadcast %cst_6 : f32 to vector<16x1xf32>
    %13 = arith.mulf %11, %12 : vector<16x1xf32>
    %14 = vector.broadcast %13 : vector<16x1xf32> to vector<16x128xf32>
    %15 = arith.subf %3, %14 : vector<16x128xf32>
    %16 = arith.mulf %15, %15 : vector<16x128xf32>
    %cst_7 = arith.constant dense<0.000000e+00> : vector<16xf32>
    %17 = vector.multi_reduction <add>, %16, %cst_7 [1] : vector<16x128xf32> to vector<16xf32>
    %18 = vector.shape_cast %17 : vector<16xf32> to vector<16x1xf32>
    %19 = arith.mulf %13, %13 : vector<16x1xf32>
    %cst_8 = arith.constant 9.600000e+01 : f32
    %20 = vector.broadcast %cst_8 : f32 to vector<16x1xf32>
    %21 = arith.mulf %20, %19 : vector<16x1xf32>
    %22 = arith.subf %18, %21 : vector<16x1xf32>
    %cst_9 = arith.constant 0.0322580636 : f32
    %23 = vector.broadcast %cst_9 : f32 to vector<16x1xf32>
    %24 = arith.mulf %22, %23 : vector<16x1xf32>
    %25 = math.sqrt %24 : vector<16x1xf32>
    %cst_10 = arith.constant 9.99999997E-7 : f32
    %26 = vector.broadcast %cst_10 : f32 to vector<16x1xf32>
    %27 = arith.addf %25, %26 : vector<16x1xf32>
    %28 = tpu.reciprocal %27 : vector<16x1xf32> -> vector<16x1xf32>
    %29 = vector.broadcast %28 : vector<16x1xf32> to vector<16x128xf32>
    %30 = arith.mulf %15, %29 : vector<16x128xf32>
    %31 = vector.broadcast %6 : vector<1x128xf32> to vector<16x128xf32>
    %32 = arith.mulf %31, %30 : vector<16x128xf32>
    %33 = vector.broadcast %9 : vector<1x128xf32> to vector<16x128xf32>
    %34 = arith.addf %32, %33 : vector<16x128xf32>
    %35 = arith.index_cast %arg1 : i32 to index
    %c0_11 = arith.constant 0 : index
    %c0_12 = arith.constant 0 : index
    %36 = vector.load %arg3[%35, %c0_11, %c0_12] : memref<2x128x128xf32, #tpu.memory_space<vmem>>, vector<1x128x128xf32>
    %37 = vector.shape_cast %36 : vector<1x128x128xf32> to vector<128x128xf32>
    %cst_13 = arith.constant dense<0.000000e+00> : vector<16x128xf32>
    %38 = tpu.matmul %34, %37, %cst_13 {dimension_numbers = #tpu.dot_dimension_numbers<[1], [0], [0], [1], [0, 0, 1, 1], [], []>} : vector<16x128xf32>, vector<128x128xf32>, vector<16x128xf32> -> vector<16x128xf32>
    %39 = arith.index_cast %arg1 : i32 to index
    %c0_14 = arith.constant 0 : index
    %c0_15 = arith.constant 0 : index
    %40 = vector.load %arg4[%39, %c0_14, %c0_15] : memref<2x1x128xf32, #tpu.memory_space<vmem>>, vector<1x1x128xf32>
    %41 = vector.shape_cast %40 : vector<1x1x128xf32> to vector<1x128xf32>
    %42 = vector.broadcast %41 : vector<1x128xf32> to vector<16x128xf32>
    %43 = arith.addf %38, %42 : vector<16x128xf32>
    %44 = arith.addf %3, %43 : vector<16x128xf32>
    %c0_16 = arith.constant 0 : index
    %c0_17 = arith.constant 0 : index
    %45 = vector.load %arg10[%c0_16, %c0_17] : memref<16x128xf32, #tpu.memory_space<vmem>>, vector<16x128xf32>
    tpu.vector_store %arg10[%c0_16, %c0_17], %44 {strides = array<i32>} : memref<16x128xf32, #tpu.memory_space<vmem>>, vector<16x128xf32>,
    %c1_i32 = arith.constant 1 : i32
    %46 = arith.cmpi eq, %arg1, %c1_i32 : i32
    %47 = arith.extui %46 : i1 to i32
    %c0_i32_18 = arith.constant 0 : i32
    %48 = arith.cmpi ne, %47, %c0_i32_18 : i32
    scf.if %48 {
      %c0_19 = arith.constant 0 : index
      %c0_20 = arith.constant 0 : index
      %49 = vector.load %arg10[%c0_19, %c0_20] : memref<16x128xf32, #tpu.memory_space<vmem>>, vector<16x128xf32>
      %c0_21 = arith.constant 0 : index
      %c0_22 = arith.constant 0 : index
      %50 = vector.load %arg7[%c0_21, %c0_22] : memref<1x128xf32, #tpu.memory_space<vmem>>, vector<1x128xf32>
      %c0_23 = arith.constant 0 : index
      %c0_24 = arith.constant 0 : index
      %51 = vector.load %arg8[%c0_23, %c0_24] : memref<1x128xf32, #tpu.memory_space<vmem>>, vector<1x128xf32>
      %cst_25 = arith.constant dense<0.000000e+00> : vector<16xf32>
      %52 = vector.multi_reduction <add>, %49, %cst_25 [1] : vector<16x128xf32> to vector<16xf32>
      %53 = vector.shape_cast %52 : vector<16xf32> to vector<16x1xf32>
      %cst_26 = arith.constant 3.125000e-02 : f32
      %54 = vector.broadcast %cst_26 : f32 to vector<16x1xf32>
      %55 = arith.mulf %53, %54 : vector<16x1xf32>
      %56 = vector.broadcast %55 : vector<16x1xf32> to vector<16x128xf32>
      %57 = arith.subf %49, %56 : vector<16x128xf32>
      %58 = arith.mulf %57, %57 : vector<16x128xf32>
      %cst_27 = arith.constant dense<0.000000e+00> : vector<16xf32>
      %59 = vector.multi_reduction <add>, %58, %cst_27 [1] : vector<16x128xf32> to vector<16xf32>
      %60 = vector.shape_cast %59 : vector<16xf32> to vector<16x1xf32>
      %61 = arith.mulf %55, %55 : vector<16x1xf32>
      %cst_28 = arith.constant 9.600000e+01 : f32
      %62 = vector.broadcast %cst_28 : f32 to vector<16x1xf32>
      %63 = arith.mulf %62, %61 : vector<16x1xf32>
      %64 = arith.subf %60, %63 : vector<16x1xf32>
      %cst_29 = arith.constant 0.0322580636 : f32
      %65 = vector.broadcast %cst_29 : f32 to vector<16x1xf32>
      %66 = arith.mulf %64, %65 : vector<16x1xf32>
      %67 = math.sqrt %66 : vector<16x1xf32>
      %cst_30 = arith.constant 9.99999997E-7 : f32
      %68 = vector.broadcast %cst_30 : f32 to vector<16x1xf32>
      %69 = arith.addf %67, %68 : vector<16x1xf32>
      %70 = tpu.reciprocal %69 : vector<16x1xf32> -> vector<16x1xf32>
      %71 = vector.broadcast %70 : vector<16x1xf32> to vector<16x128xf32>
      %72 = arith.mulf %57, %71 : vector<16x128xf32>
      %73 = vector.broadcast %50 : vector<1x128xf32> to vector<16x128xf32>
      %74 = arith.mulf %73, %72 : vector<16x128xf32>
      %75 = vector.broadcast %51 : vector<1x128xf32> to vector<16x128xf32>
      %76 = arith.addf %74, %75 : vector<16x128xf32>
      %c0_31 = arith.constant 0 : index
      %c0_32 = arith.constant 0 : index
      %77 = vector.load %arg9[%c0_31, %c0_32] : memref<16x128xf32, #tpu.memory_space<vmem>>, vector<16x128xf32>
      tpu.vector_store %arg9[%c0_31, %c0_32], %76 {strides = array<i32>} : memref<16x128xf32, #tpu.memory_space<vmem>>, vector<16x128xf32>,
    } else {
    }
    return
  }
  func.func @transform_0(%arg0: i32, %arg1: i32) -> (i32, i32) {
    %c0_i32 = arith.constant 0 : i32
    %c0_i32_0 = arith.constant 0 : i32
    return %arg0, %c0_i32 : i32, i32
  }
  func.func @transform_1(%arg0: i32, %arg1: i32) -> (i32, i32, i32) {
    %c0_i32 = arith.constant 0 : i32
    %c0_i32_0 = arith.constant 0 : i32
    %c0_i32_1 = arith.constant 0 : i32
    %c0_i32_2 = arith.constant 0 : i32
    return %c0_i32, %c0_i32_0, %c0_i32_1 : i32, i32, i32
  }
  func.func @transform_2(%arg0: i32, %arg1: i32) -> (i32, i32, i32) {
    %c0_i32 = arith.constant 0 : i32
    %c0_i32_0 = arith.constant 0 : i32
    %c0_i32_1 = arith.constant 0 : i32
    %c0_i32_2 = arith.constant 0 : i32
    return %c0_i32, %c0_i32_0, %c0_i32_1 : i32, i32, i32
  }
  func.func @transform_3(%arg0: i32, %arg1: i32) -> (i32, i32, i32) {
    %c0_i32 = arith.constant 0 : i32
    %c0_i32_0 = arith.constant 0 : i32
    %c0_i32_1 = arith.constant 0 : i32
    %c0_i32_2 = arith.constant 0 : i32
    return %c0_i32, %c0_i32_0, %c0_i32_1 : i32, i32, i32
  }
  func.func @transform_4(%arg0: i32, %arg1: i32) -> (i32, i32, i32) {
    %c0_i32 = arith.constant 0 : i32
    %c0_i32_0 = arith.constant 0 : i32
    %c0_i32_1 = arith.constant 0 : i32
    %c0_i32_2 = arith.constant 0 : i32
    return %c0_i32, %c0_i32_0, %c0_i32_1 : i32, i32, i32
  }
  func.func @transform_5(%arg0: i32, %arg1: i32) -> (i32, i32) {
    %c0_i32 = arith.constant 0 : i32
    %c0_i32_0 = arith.constant 0 : i32
    %c0_i32_1 = arith.constant 0 : i32
    return %c0_i32, %c0_i32_0 : i32, i32
  }
  func.func @transform_6(%arg0: i32, %arg1: i32) -> (i32, i32) {
    %c0_i32 = arith.constant 0 : i32
    %c0_i32_0 = arith.constant 0 : i32
    %c0_i32_1 = arith.constant 0 : i32
    return %c0_i32, %c0_i32_0 : i32, i32
  }
  func.func @transform_7(%arg0: i32, %arg1: i32) -> (i32, i32) {
    %c0_i32 = arith.constant 0 : i32
    %c0_i32_0 = arith.constant 0 : i32
    return %arg0, %c0_i32 : i32, i32
  }
}

</mosaic_0001>

<llo_original>
// kernel: tpu_custom_call.1
$region0: #{tpu_custom_call.1}
  #allocation0 [shape = 'u32[]', space=smem, size = 0x4, offset = 0x4, fixed_abs, tag = 'smem constant byte address 0x4 - core index']
  #allocation1 [shape = 'u32[144,128]{1,0:T(1,128)}', space=vmem, size = 0x12000, scoped, tag = 'internal scratch']
  #allocation2 [shape = 'f32[16,128]{1,0:T(8,128)}', space=vmem, size = 0x2000, scoped, tag = 'scratch operand']
  %s0 = inlined_call_operand.hbm [shape: f32[16,128], index: 0, kind: input, shape index: {}]
  %s1 = inlined_call_operand.hbm [shape: f32[2,128,128], index: 1, kind: input, shape index: {}]
  %s2 = inlined_call_operand.vmem [shape: f32[2,1,128], index: 2, kind: input, shape index: {}]
  %s3 = inlined_call_operand.vmem [shape: f32[2,1,128], index: 3, kind: input, shape index: {}]
  %s4 = inlined_call_operand.vmem [shape: f32[2,1,128], index: 4, kind: input, shape index: {}]
  %s5 = inlined_call_operand.vmem [shape: f32[1,128], index: 5, kind: input, shape index: {}]
  %s6 = inlined_call_operand.vmem [shape: f32[1,128], index: 6, kind: input, shape index: {}]
  %s7 = inlined_call_operand.hbm [shape: f32[16,128], index: 7, kind: output, shape index: {}]
  %s8 = sld [smem:[#allocation0]]
  $region77: #{tpu_custom_call.1} parent=0
    _
  %s10 = ssub.s32 1, %s8
  %s11 = scalar_select 0, %s10, %s8
  $region1: #{tpu_custom_call.1} parent=0
    #allocation3 [shape = 'u8[8192]{0}', space=vmem, size = 0x2000, scoped, tag = 'input window, operand 0, single buffered']
    #allocation4 [shape = 's32[2]{0}', space=sflag, size = 0x8, scoped, tag = 'scoped memory for tpu_custom_call.1']
    #allocation5 [shape = 's32[2]{0}', space=sflag, size = 0x8, scoped, tag = 'scoped memory for tpu_custom_call.1']
    #allocation6 [shape = 'u8[131072]{0}', space=vmem, size = 0x20000, scoped, tag = 'input window, operand 1, single buffered']
    #allocation7 [shape = 's32[1]{0}', space=sflag, size = 0x4, scoped, tag = 'scoped memory for tpu_custom_call.1']
    #allocation8 [shape = 'u8[8192]{0}', space=vmem, size = 0x2000, scoped, tag = 'output window, operand 0, single buffered']
    %12 = vsyncpa [#allocation4], 0
    %13 = vsyncpa [#allocation7], 0
    %14 = vsyncpa [#allocation5], 0
    loop: start=0, step=1, limit=4
    $region2: #{tpu_custom_call.1} parent=1 // loop_pre_header
      _
    $region3: #{tpu_custom_call.1} parent=1 // loop_header
      %s16 = sphi 0, %s20
      %p17 = scmp.ge.s32.totalorder %s16, 4
      %s23 = sphi 0, %s35
      %s24 = sphi 0, %s31
      %s25 = sphi 0, %s23
      %s26 = sphi 0, %s24
      %s27 = sphi 0, %s25
      %s28 = sphi 0, %s26
      %s38 = sphi 0, %s40
      %s41 = sphi 0, %s38
      %s42 = sphi 0, %s41
      %s58 = sphi 0, %s42
      %s62 = sphi 0, %s62
      %s64 = sphi 0, %s62
      %s65 = sphi 0, %s64
      %s79 = sphi 0, %s65
      %s83 = sphi 0, %s83
      %s85 = sphi 0, %s83
      %s86 = sphi 0, %s85
      %s100 = sphi 0, %s86
      %s104 = sphi 0, %s104
      %s106 = sphi 0, %s104
      %s107 = sphi 0, %s106
      %s121 = sphi 0, %s107
      %s125 = sphi 0, %s125
      %s127 = sphi 0, %s125
      %s128 = sphi 0, %s127
      %s142 = sphi 0, %s128
      %s146 = sphi 0, %s146
      %s148 = sphi 0, %s146
      %s149 = sphi 0, %s148
      %s163 = sphi 0, %s149
      %s167 = sphi 0, %s167
      %s169 = sphi 0, %s167
      %s170 = sphi 0, %s169
      %s184 = sphi 0, %s170
      %s190 = sphi 0, %s192
      %s193 = sphi 0, %s190
      %s194 = sphi 0, %s193
      %s210 = sphi 0, %s194
    $region4: #{tpu_custom_call.1} parent=1 // loop_header_branch
      %19 = sbr.rel (%p17) target = $region8
    $region5: #{tpu_custom_call.1} parent=1 // loop_body
      %s21 = ssub.s32 %s16, 1
      %s22 = ssub.s32 %s16, 2
      %s29 = sadd.s32 1, %s24
      %p30 = scmp.ge.s32.totalorder %s29, 2
      %s31 = scalar_select %p30, 0, %s29
      %s32 = sadd.s32 1, %s23
      %s33 = scalar_select %p30, %s32, %s23
      %p34 = scmp.ge.s32.totalorder %s33, 1
      %s35 = scalar_select %p34, 0, %s33
      %s36 = ssub.s32 %s23, %s35
      %p37 = scmp.eq.s32.totalorder %s36, 0
      %s39 = sadd.s32 %s38, 1
      %s40 = scalar_select %p37, %s38, %s39
      %p43 = pneg %p37
      %p44 = scmp.eq.s32.totalorder %s16, 1
      %p45 = por %p43, %p44
      %p46 = scmp.ne.s32.totalorder %s38, %s41
      %p47 = scmp.eq.s32.totalorder %s16, 0
      %p48 = por %p46, %p47
      %p49 = scmp.ne.s32.totalorder %s38, %s41
      %p50 = scmp.eq.s32.totalorder %s21, 1
      %p51 = por %p49, %p50
      %p52 = scmp.ne.s32.totalorder %s41, %s42
      %p53 = scmp.eq.s32.totalorder %s21, 0
      %p54 = por %p52, %p53
      %p55 = scmp.ne.s32.totalorder %s41, %s42
      %p56 = scmp.eq.s32.totalorder %s22, 1
      %p57 = por %p55, %p56
      %p59 = scmp.ne.s32.totalorder %s42, %s58
      %p60 = scmp.eq.s32.totalorder %s22, 0
      %p61 = por %p59, %p60
      %s63 = sadd.s32 %s62, 1
      %p66 = scmp.eq.s32.totalorder %s16, 1
      %p67 = scmp.ne.s32.totalorder %s62, %s64
      %p68 = scmp.eq.s32.totalorder %s16, 0
      %p69 = por %p67, %p68
      %p70 = scmp.ne.s32.totalorder %s62, %s64
      %p71 = scmp.eq.s32.totalorder %s21, 1
      %p72 = por %p70, %p71
      %p73 = scmp.ne.s32.totalorder %s64, %s65
      %p74 = scmp.eq.s32.totalorder %s21, 0
      %p75 = por %p73, %p74
      %p76 = scmp.ne.s32.totalorder %s64, %s65
      %p77 = scmp.eq.s32.totalorder %s22, 1
      %p78 = por %p76, %p77
      %p80 = scmp.ne.s32.totalorder %s65, %s79
      %p81 = scmp.eq.s32.totalorder %s22, 0
      %p82 = por %p80, %p81
      %s84 = sadd.s32 %s83, 1
      %p87 = scmp.eq.s32.totalorder %s16, 1
      %p88 = scmp.ne.s32.totalorder %s83, %s85
      %p89 = scmp.eq.s32.totalorder %s16, 0
      %p90 = por %p88, %p89
      %p91 = scmp.ne.s32.totalorder %s83, %s85
      %p92 = scmp.eq.s32.totalorder %s21, 1
      %p93 = por %p91, %p92
      %p94 = scmp.ne.s32.totalorder %s85, %s86
      %p95 = scmp.eq.s32.totalorder %s21, 0
      %p96 = por %p94, %p95
      %p97 = scmp.ne.s32.totalorder %s85, %s86
      %p98 = scmp.eq.s32.totalorder %s22, 1
      %p99 = por %p97, %p98
      %p101 = scmp.ne.s32.totalorder %s86, %s100
      %p102 = scmp.eq.s32.totalorder %s22, 0
      %p103 = por %p101, %p102
      %s105 = sadd.s32 %s104, 1
      %p108 = scmp.eq.s32.totalorder %s16, 1
      %p109 = scmp.ne.s32.totalorder %s104, %s106
      %p110 = scmp.eq.s32.totalorder %s16, 0
      %p111 = por %p109, %p110
      %p112 = scmp.ne.s32.totalorder %s104, %s106
      %p113 = scmp.eq.s32.totalorder %s21, 1
      %p114 = por %p112, %p113
      %p115 = scmp.ne.s32.totalorder %s106, %s107
      %p116 = scmp.eq.s32.totalorder %s21, 0
      %p117 = por %p115, %p116
      %p118 = scmp.ne.s32.totalorder %s106, %s107
      %p119 = scmp.eq.s32.totalorder %s22, 1
      %p120 = por %p118, %p119
      %p122 = scmp.ne.s32.totalorder %s107, %s121
      %p123 = scmp.eq.s32.totalorder %s22, 0
      %p124 = por %p122, %p123
      %s126 = sadd.s32 %s125, 1
      %p129 = scmp.eq.s32.totalorder %s16, 1
      %p130 = scmp.ne.s32.totalorder %s125, %s127
      %p131 = scmp.eq.s32.totalorder %s16, 0
      %p132 = por %p130, %p131
      %p133 = scmp.ne.s32.totalorder %s125, %s127
      %p134 = scmp.eq.s32.totalorder %s21, 1
      %p135 = por %p133, %p134
      %p136 = scmp.ne.s32.totalorder %s127, %s128
      %p137 = scmp.eq.s32.totalorder %s21, 0
      %p138 = por %p136, %p137
      %p139 = scmp.ne.s32.totalorder %s127, %s128
      %p140 = scmp.eq.s32.totalorder %s22, 1
      %p141 = por %p139, %p140
      %p143 = scmp.ne.s32.totalorder %s128, %s142
      %p144 = scmp.eq.s32.totalorder %s22, 0
      %p145 = por %p143, %p144
      %s147 = sadd.s32 %s146, 1
      %p150 = scmp.eq.s32.totalorder %s16, 1
      %p151 = scmp.ne.s32.totalorder %s146, %s148
      %p152 = scmp.eq.s32.totalorder %s16, 0
      %p153 = por %p151, %p152
      %p154 = scmp.ne.s32.totalorder %s146, %s148
      %p155 = scmp.eq.s32.totalorder %s21, 1
      %p156 = por %p154, %p155
      %p157 = scmp.ne.s32.totalorder %s148, %s149
      %p158 = scmp.eq.s32.totalorder %s21, 0
      %p159 = por %p157, %p158
      %p160 = scmp.ne.s32.totalorder %s148, %s149
      %p161 = scmp.eq.s32.totalorder %s22, 1
      %p162 = por %p160, %p161
      %p164 = scmp.ne.s32.totalorder %s149, %s163
      %p165 = scmp.eq.s32.totalorder %s22, 0
      %p166 = por %p164, %p165
      %s168 = sadd.s32 %s167, 1
      %p171 = scmp.eq.s32.totalorder %s16, 1
      %p172 = scmp.ne.s32.totalorder %s167, %s169
      %p173 = scmp.eq.s32.totalorder %s16, 0
      %p174 = por %p172, %p173
      %p175 = scmp.ne.s32.totalorder %s167, %s169
      %p176 = scmp.eq.s32.totalorder %s21, 1
      %p177 = por %p175, %p176
      %p178 = scmp.ne.s32.totalorder %s169, %s170
      %p179 = scmp.eq.s32.totalorder %s21, 0
      %p180 = por %p178, %p179
      %p181 = scmp.ne.s32.totalorder %s169, %s170
      %p182 = scmp.eq.s32.totalorder %s22, 1
      %p183 = por %p181, %p182
      %p185 = scmp.ne.s32.totalorder %s170, %s184
      %p186 = scmp.eq.s32.totalorder %s22, 0
      %p187 = por %p185, %p186
      %s188 = ssub.s32 %s23, %s35
      %p189 = scmp.eq.s32.totalorder %s188, 0
      %s191 = sadd.s32 %s190, 1
      %s192 = scalar_select %p189, %s190, %s191
      %p195 = pneg %p189
      %p196 = scmp.eq.s32.totalorder %s16, 1
      %p197 = por %p195, %p196
      %p198 = scmp.ne.s32.totalorder %s190, %s193
      %p199 = scmp.eq.s32.totalorder %s16, 0
      %p200 = por %p198, %p199
      %p201 = scmp.ne.s32.totalorder %s190, %s193
      %p202 = scmp.eq.s32.totalorder %s21, 1
      %p203 = por %p201, %p202
      %p204 = scmp.ne.s32.totalorder %s193, %s194
      %p205 = scmp.eq.s32.totalorder %s21, 0
      %p206 = por %p204, %p205
      %p207 = scmp.ne.s32.totalorder %s193, %s194
      %p208 = scmp.eq.s32.totalorder %s22, 1
      %p209 = por %p207, %p208
      %p211 = scmp.ne.s32.totalorder %s194, %s210
      %p212 = scmp.eq.s32.totalorder %s22, 0
      %p213 = por %p211, %p212
      %p214 = scmp.le.s32.totalorder 1, %s16
      %p215 = scmp.lt.s32.totalorder %s16, 3
      %p216 = pnand %p214, %p215
      %p217 = pneg %p216
      // Predicated region
      $region9: #{tpu_custom_call.1} parent=5 // pred_check
        _
      $region10: #{tpu_custom_call.1} parent=5 // pred_check_branch
        %219 = sbr.rel (%p216) target = $region12
      $region11: #{tpu_custom_call.1} parent=5 // pred_region
        %s220 = ssub.s32 %s16, 1
        // Predicated region
        $region13: #{tpu_custom_call.1} parent=11 // pred_check
          %p221 = pneg %p54
        $region14: #{tpu_custom_call.1} parent=11 // pred_check_branch
          %223 = sbr.rel (%p221) target = $region16
        $region15: #{tpu_custom_call.1} parent=11 // pred_region
          %s224 = smul.u32 2, %s25
          %s226 = ssub.s32 256, 256
          %227 = vsyncadd [#allocation4], %s226
          %s228 = smul.addr %s224, 128
          %s229 = scalar_lea.hbm %s0, %s228
          %s230 = sshll.u32 [#allocation3], 4
          %s231 = int_to_ptr.vmem [resolvable:$true] %s230
          %236 = dma.hbm_to_vmem [thread:$0]  %s229, 256, %s231, [#allocation4], 128, 128, 8
        $region16: #{tpu_custom_call.1} parent=11 // pred_fallthru
          _
        // Predicated region
        $region17: #{tpu_custom_call.1} parent=11 // pred_check
          %p237 = pneg %p75
        $region18: #{tpu_custom_call.1} parent=11 // pred_check_branch
          %239 = sbr.rel (%p237) target = $region20
        $region19: #{tpu_custom_call.1} parent=11 // pred_region
          %s241 = ssub.s32 4096, 4096
          %242 = vsyncadd [#allocation7], %s241
          %s243 = sshll.u32 [#allocation6], 4
          %s244 = int_to_ptr.vmem [resolvable:$true] %s243
          %249 = dma.hbm_to_vmem [thread:$0]  %s1, 4096, %s244, [#allocation7], 128, 128, 8
        $region20: #{tpu_custom_call.1} parent=11 // pred_fallthru
          _
        // Predicated region
        $region21: #{tpu_custom_call.1} parent=11 // pred_check
          %p250 = pneg %p96
        $region22: #{tpu_custom_call.1} parent=11 // pred_check_branch
          %252 = sbr.rel (%p250) target = $region24
        $region23: #{tpu_custom_call.1} parent=11 // pred_region
          _
        $region24: #{tpu_custom_call.1} parent=11 // pred_fallthru
          _
        // Predicated region
        $region25: #{tpu_custom_call.1} parent=11 // pred_check
          %p253 = pneg %p117
        $region26: #{tpu_custom_call.1} parent=11 // pred_check_branch
          %255 = sbr.rel (%p253) target = $region28
        $region27: #{tpu_custom_call.1} parent=11 // pred_region
          _
        $region28: #{tpu_custom_call.1} parent=11 // pred_fallthru
          _
        // Predicated region
        $region29: #{tpu_custom_call.1} parent=11 // pred_check
          %p256 = pneg %p138
        $region30: #{tpu_custom_call.1} parent=11 // pred_check_branch
          %258 = sbr.rel (%p256) target = $region32
        $region31: #{tpu_custom_call.1} parent=11 // pred_region
          _
        $region32: #{tpu_custom_call.1} parent=11 // pred_fallthru
          _
        // Predicated region
        $region33: #{tpu_custom_call.1} parent=11 // pred_check
          %p259 = pneg %p159
        $region34: #{tpu_custom_call.1} parent=11 // pred_check_branch
          %261 = sbr.rel (%p259) target = $region36
        $region35: #{tpu_custom_call.1} parent=11 // pred_region
          _
        $region36: #{tpu_custom_call.1} parent=11 // pred_fallthru
          _
        // Predicated region
        $region37: #{tpu_custom_call.1} parent=11 // pred_check
          %p262 = pneg %p180
        $region38: #{tpu_custom_call.1} parent=11 // pred_check_branch
          %264 = sbr.rel (%p262) target = $region40
        $region39: #{tpu_custom_call.1} parent=11 // pred_region
          _
        $region40: #{tpu_custom_call.1} parent=11 // pred_fallthru
          _
      $region12: #{tpu_custom_call.1} parent=5 // pred_fallthru
        _
      %p265 = scmp.lt.s32.totalorder %s16, 2
      // Predicated region
      $region41: #{tpu_custom_call.1} parent=5 // pred_check
        %p266 = pneg %p265
      $region42: #{tpu_custom_call.1} parent=5 // pred_check_branch
        %268 = sbr.rel (%p266) target = $region44
      $region43: #{tpu_custom_call.1} parent=5 // pred_region
        _
      $region44: #{tpu_custom_call.1} parent=5 // pred_fallthru
        _
      %p269 = scmp.le.s32.totalorder 1, %s16
      %p270 = scmp.lt.s32.totalorder %s16, 3
      %p271 = pnand %p269, %p270
      %p272 = pneg %p271
      // Predicated region
      $region45: #{tpu_custom_call.1} parent=5 // pred_check
        _
      $region46: #{tpu_custom_call.1} parent=5 // pred_check_branch
        %274 = sbr.rel (%p271) target = $region48
      $region47: #{tpu_custom_call.1} parent=5 // pred_region
        %s275 = ssub.s32 %s16, 1
        // Predicated region
        $region49: #{tpu_custom_call.1} parent=47 // pred_check
          %p276 = pneg %p54
        $region50: #{tpu_custom_call.1} parent=47 // pred_check_branch
          %278 = sbr.rel (%p276) target = $region52
        $region51: #{tpu_custom_call.1} parent=47 // pred_region
          %279 = dma.done [#allocation4], 256
        $region52: #{tpu_custom_call.1} parent=47 // pred_fallthru
          _
        // Predicated region
        $region53: #{tpu_custom_call.1} parent=47 // pred_check
          %p280 = pneg %p75
        $region54: #{tpu_custom_call.1} parent=47 // pred_check_branch
          %282 = sbr.rel (%p280) target = $region56
        $region55: #{tpu_custom_call.1} parent=47 // pred_region
          %283 = dma.done [#allocation7], 4096
        $region56: #{tpu_custom_call.1} parent=47 // pred_fallthru
          _
        %p284 = pneg %p54
        %p285 = pneg %p51
        %p286 = pneg %p75
        %p287 = pneg %p72
        %p288 = pneg %p96
        %p289 = pneg %p93
        %p290 = pneg %p117
        %p291 = pneg %p114
        %p292 = pneg %p138
        %p293 = pneg %p135
        %p294 = pneg %p159
        %p295 = pneg %p156
        %p296 = pneg %p180
        %p297 = pneg %p177
        %p298 = pneg %p206
        %p299 = pneg %p203
        %s300 = smul.u32 2, %s25
        %s301 = smul.u32 2, %s25
        %p302 = scmp.eq.s32.totalorder %s26, 0
        // Predicated region
        $region57: #{tpu_custom_call.1} parent=47 // pred_check
          %p303 = pneg %p302
        $region58: #{tpu_custom_call.1} parent=47 // pred_check_branch
          %305 = sbr.rel (%p303) target = $region60
        $region59: #{tpu_custom_call.1} parent=47 // pred_region
          %v306 = vld [vmem:[#allocation3] sm:$0xff]
          %v307 = vld [vmem:[#allocation3 + $0x8] sm:$0xff]
          %308 = vst [vmem:[#allocation2] sm:$0xff] %v306
          %309 = vst [vmem:[#allocation2 + $0x8] sm:$0xff] %v307
        $region60: #{tpu_custom_call.1} parent=47 // pred_fallthru
          _
        %v310 = vld [vmem:[#allocation2] sm:$0xff]
        %v311 = vld [vmem:[#allocation2 + $0x8] sm:$0xff]
        %s312 = scalar_lea.vmem %s3, %s26
        %v313 = vld [vmem:[%s312] sm:$0x1]
        %s314 = scalar_lea.vmem %s4, %s26
        %v315 = vld [vmem:[%s314] sm:$0x1]
        %316 = vadd.xlane.f32.xlu0 %v310
        %v317 = vpop.xlane.xlu0 %316
        %318 = vadd.xlane.f32.xlu0 %v311
        %v319 = vpop.xlane.xlu0 %318
        %v320 = vmul.f32 %v317, 0.03125
        %v321 = vmul.f32 %v319, 0.03125
        %v322 = vsub.f32 %v310, %v320
        %v323 = vsub.f32 %v311, %v321
        %v324 = vmul.f32 %v322, %v322
        %v325 = vmul.f32 %v323, %v323
        %326 = vadd.xlane.f32.xlu0 %v324
        %v327 = vpop.xlane.xlu0 %326
        %328 = vadd.xlane.f32.xlu0 %v325
        %v329 = vpop.xlane.xlu0 %328
        %v330 = vmul.f32 %v320, %v320
        %v331 = vmul.f32 %v321, %v321
        %v332 = vmul.f32 %v330, 96.0
        %v333 = vmul.f32 %v331, 96.0
        %v334 = vsub.f32 %v327, %v332
        %v335 = vsub.f32 %v329, %v333
        %v336 = vmul.f32 %v334, 0.032258064
        %v337 = vmul.f32 %v335, 0.032258064
        %v338 = vrsqrt.pop %v336
        %v339 = vmul.f32 %v336, %v338
        %vm340 = vcmp.eq.f32.partialorder %v336, inf
        %v341 = vsel %vm340, %v336, %v339
        %vm342 = vcmp.eq.f32.partialorder %v336, 0.0
        %v343 = vand.u32 %v336, 2147483648
        %v344 = vsel %vm342, %v343, %v341
        %v345 = vrsqrt.pop %v337
        %v346 = vmul.f32 %v337, %v345
        %vm347 = vcmp.eq.f32.partialorder %v337, inf
        %v348 = vsel %vm347, %v337, %v346
        %vm349 = vcmp.eq.f32.partialorder %v337, 0.0
        %v350 = vand.u32 %v337, 2147483648
        %v351 = vsel %vm349, %v350, %v348
        %v352 = vadd.f32 %v344, 1e-06
        %v353 = vadd.f32 %v351, 1e-06
        %v354 = vrcp.pop %v352
        %v355 = vrcp.pop %v353
        %v356 = vmul.f32 %v322, %v354
        %v357 = vmul.f32 %v323, %v355
        %v359 = vlaneseq
        %v360 = vshrl.u32 %v359, 7
        %v361 = vsub.s32 0, %v360
        %v362 = vrot.slane %v313, %v361
        %v364 = vmul.f32 %v362, %v356
        %v365 = vmul.f32 %v362, %v357
        %v367 = vlaneseq
        %v368 = vshrl.u32 %v367, 7
        %v369 = vsub.s32 0, %v368
        %v370 = vrot.slane %v315, %v369
        %v372 = vadd.f32 %v364, %v370
        %v373 = vadd.f32 %v365, %v370
        %s374 = smul.u32 %s26, 128
        %s375 = scalar_lea.vmem [#allocation6], %s374
        %v376 = vld [vmem:[%s375] sm:$0xff]
        %v377 = vld [vmem:[%s375 + $0x8] sm:$0xff]
        %v378 = vld [vmem:[%s375 + $0x10] sm:$0xff]
        %v379 = vld [vmem:[%s375 + $0x18] sm:$0xff]
        %v380 = vld [vmem:[%s375 + $0x20] sm:$0xff]
        %v381 = vld [vmem:[%s375 + $0x28] sm:$0xff]
        %v382 = vld [vmem:[%s375 + $0x30] sm:$0xff]
        %v383 = vld [vmem:[%s375 + $0x38] sm:$0xff]
        %v384 = vld [vmem:[%s375 + $0x40] sm:$0xff]
        %v385 = vld [vmem:[%s375 + $0x48] sm:$0xff]
        %v386 = vld [vmem:[%s375 + $0x50] sm:$0xff]
        %v387 = vld [vmem:[%s375 + $0x58] sm:$0xff]
        %v388 = vld [vmem:[%s375 + $0x60] sm:$0xff]
        %v389 = vld [vmem:[%s375 + $0x68] sm:$0xff]
        %v390 = vld [vmem:[%s375 + $0x70] sm:$0xff]
        %v391 = vld [vmem:[%s375 + $0x78] sm:$0xff]
        %s392 = scalar_lea.vmem %s2, %s26
        %v393 = vld [vmem:[%s392] sm:$0x1]
        %v395 = vlaneseq
        %v396 = vshrl.u32 %v395, 7
        %v397 = vsub.s32 0, %v396
        %v398 = vrot.slane %v393, %v397
        %400 = vmatprep.subr.mxu0 0.0
        %401 = vmatpush1.msra.mxu0 %v376
        %402 = vmatprep.subr.mxu0 0.0
        %403 = vmatpush1.msra.mxu0 %v377
        %404 = vmatprep.subr.mxu0 0.0
        %405 = vmatpush1.msra.mxu0 %v378
        %406 = vmatprep.subr.mxu0 0.0
        %407 = vmatpush1.msra.mxu0 %v379
        %408 = vmatprep.subr.mxu0 0.0
        %409 = vmatpush1.msra.mxu0 %v380
        %410 = vmatprep.subr.mxu0 0.0
        %411 = vmatpush1.msra.mxu0 %v381
        %412 = vmatprep.subr.mxu0 0.0
        %413 = vmatpush1.msra.mxu0 %v382
        %414 = vmatprep.subr.mxu0 0.0
        %415 = vmatpush1.msra.mxu0 %v383
        %416 = vmatprep.subr.mxu0 0.0
        %417 = vmatpush1.msra.mxu0 %v384
        %418 = vmatprep.subr.mxu0 0.0
        %419 = vmatpush1.msra.mxu0 %v385
        %420 = vmatprep.subr.mxu0 0.0
        %421 = vmatpush1.msra.mxu0 %v386
        %422 = vmatprep.subr.mxu0 0.0
        %423 = vmatpush1.msra.mxu0 %v387
        %424 = vmatprep.subr.mxu0 0.0
        %425 = vmatpush1.msra.mxu0 %v388
        %426 = vmatprep.subr.mxu0 0.0
        %427 = vmatpush1.msra.mxu0 %v389
        %428 = vmatprep.subr.mxu0 0.0
        %429 = vmatpush1.msra.mxu0 %v390
        %430 = vmatprep.subr.mxu0 0.0
        %431 = vmatpush1.msra.mxu0 %v391
        %432 = vmatprep.subr.mxu0 0.0
        %433 = vmatpush1.msra.mxu0 0.0
        %434 = vmatprep.subr.mxu0 0.0
        %435 = vmatpush1.msra.mxu0 0.0
        %436 = vmatprep.subr.mxu0 0.0
        %437 = vmatpush1.msra.mxu0 0.0
        %438 = vmatprep.subr.mxu0 0.0
        %439 = vmatpush1.msra.mxu0 0.0
        %440 = vmatprep.subr.mxu0 0.0
        %441 = vmatpush1.msra.mxu0 0.0
        %442 = vmatprep.subr.mxu0 0.0
        %443 = vmatpush1.msra.mxu0 0.0
        %444 = vmatprep.subr.mxu0 0.0
        %445 = vmatpush1.msra.mxu0 0.0
        %446 = vmatprep.subr.mxu0 0.0
        %447 = vmatpush1.msra.mxu0 0.0
        %448 = vmatprep.subr.mxu0 0.0
        %449 = vmatpush1.msra.mxu0 0.0
        %450 = vmatprep.subr.mxu0 0.0
        %451 = vmatpush1.msra.mxu0 0.0
        %452 = vmatprep.subr.mxu0 0.0
        %453 = vmatpush1.msra.mxu0 0.0
        %454 = vmatprep.subr.mxu0 0.0
        %455 = vmatpush1.msra.mxu0 0.0
        %456 = vmatprep.subr.mxu0 0.0
        %457 = vmatpush1.msra.mxu0 0.0
        %458 = vmatprep.subr.mxu0 0.0
        %459 = vmatpush1.msra.mxu0 0.0
        %460 = vmatprep.subr.mxu0 0.0
        %461 = vmatpush1.msra.mxu0 0.0
        %462 = vmatprep.subr.mxu0 0.0
        %463 = vmatpush1.msra.mxu0 0.0
        %464 = vmatprep.mubr.f32.mxu0 0.0
        %465 = vmatmul.mubr.f32.gmra.mrb[0].mxu0 %v372
        %v466 = vpop.f32.mrb[0].mxu0
        %v467 = vadd.f32 %v398, %v466
        %v468 = vpop.f32.mrb[0].mxu0
        %469 = vmatprep.mubr.f32.mxu0 0.0
        %470 = vmatmul.mubr.f32.gmra.mrb[0].mxu0 %v373
        %v471 = vpop.f32.mrb[0].mxu0
        %v472 = vadd.f32 %v398, %v471
        %v473 = vpop.f32.mrb[0].mxu0
        %474 = vdwg.mxu0
        %v475 = vadd.f32 %v310, %v467
        %v476 = vadd.f32 %v311, %v472
        %477 = vst [vmem:[#allocation2] sm:$0xff] %v475
        %478 = vst [vmem:[#allocation2 + $0x8] sm:$0xff] %v476
        %p479 = scmp.eq.s32.totalorder %s26, 1
        // Predicated region
        $region61: #{tpu_custom_call.1} parent=47 // pred_check
          %p480 = pneg %p479
        $region62: #{tpu_custom_call.1} parent=47 // pred_check_branch
          %482 = sbr.rel (%p480) target = $region64
        $region63: #{tpu_custom_call.1} parent=47 // pred_region
          %v483 = vld [vmem:[#allocation2] sm:$0xff]
          %v484 = vld [vmem:[#allocation2 + $0x8] sm:$0xff]
          %v485 = vld [vmem:[%s5] sm:$0x1]
          %v486 = vld [vmem:[%s6] sm:$0x1]
          %487 = vadd.xlane.f32.xlu0 %v483
          %v488 = vpop.xlane.xlu0 %487
          %489 = vadd.xlane.f32.xlu0 %v484
          %v490 = vpop.xlane.xlu0 %489
          %v491 = vmul.f32 %v488, 0.03125
          %v492 = vmul.f32 %v490, 0.03125
          %v493 = vsub.f32 %v483, %v491
          %v494 = vsub.f32 %v484, %v492
          %v495 = vmul.f32 %v493, %v493
          %v496 = vmul.f32 %v494, %v494
          %497 = vadd.xlane.f32.xlu0 %v495
          %v498 = vpop.xlane.xlu0 %497
          %499 = vadd.xlane.f32.xlu0 %v496
          %v500 = vpop.xlane.xlu0 %499
          %v501 = vmul.f32 %v491, %v491
          %v502 = vmul.f32 %v492, %v492
          %v503 = vmul.f32 %v501, 96.0
          %v504 = vmul.f32 %v502, 96.0
          %v505 = vsub.f32 %v498, %v503
          %v506 = vsub.f32 %v500, %v504
          %v507 = vmul.f32 %v505, 0.032258064
          %v508 = vmul.f32 %v506, 0.032258064
          %v509 = vrsqrt.pop %v507
          %v510 = vmul.f32 %v507, %v509
          %vm511 = vcmp.eq.f32.partialorder %v507, inf
          %v512 = vsel %vm511, %v507, %v510
          %vm513 = vcmp.eq.f32.partialorder %v507, 0.0
          %v514 = vand.u32 %v507, 2147483648
          %v515 = vsel %vm513, %v514, %v512
          %v516 = vrsqrt.pop %v508
          %v517 = vmul.f32 %v508, %v516
          %vm518 = vcmp.eq.f32.partialorder %v508, inf
          %v519 = vsel %vm518, %v508, %v517
          %vm520 = vcmp.eq.f32.partialorder %v508, 0.0
          %v521 = vand.u32 %v508, 2147483648
          %v522 = vsel %vm520, %v521, %v519
          %v523 = vadd.f32 %v515, 1e-06
          %v524 = vadd.f32 %v522, 1e-06
          %v525 = vrcp.pop %v523
          %v526 = vrcp.pop %v524
          %v527 = vmul.f32 %v493, %v525
          %v528 = vmul.f32 %v494, %v526
          %v530 = vlaneseq
          %v531 = vshrl.u32 %v530, 7
          %v532 = vsub.s32 0, %v531
          %v533 = vrot.slane %v485, %v532
          %v535 = vmul.f32 %v533, %v527
          %v536 = vmul.f32 %v533, %v528
          %v538 = vlaneseq
          %v539 = vshrl.u32 %v538, 7
          %v540 = vsub.s32 0, %v539
          %v541 = vrot.slane %v486, %v540
          %v543 = vadd.f32 %v535, %v541
          %v544 = vadd.f32 %v536, %v541
          %545 = vst [vmem:[#allocation8] sm:$0xff] %v543
          %546 = vst [vmem:[#allocation8 + $0x8] sm:$0xff] %v544
        $region64: #{tpu_custom_call.1} parent=47 // pred_fallthru
          _
        // Predicated region
        $region65: #{tpu_custom_call.1} parent=47 // pred_check
          %p547 = pneg %p203
        $region66: #{tpu_custom_call.1} parent=47 // pred_check_branch
          %549 = sbr.rel (%p547) target = $region68
        $region67: #{tpu_custom_call.1} parent=47 // pred_region
          %s550 = smul.u32 2, %s25
          %s552 = ssub.s32 256, 256
          %553 = vsyncadd [#allocation5], %s552
          %s554 = smul.addr %s550, 128
          %s555 = scalar_lea.hbm %s7, %s554
          %s556 = sshll.u32 [#allocation8], 4
          %s557 = int_to_ptr.vmem [resolvable:$true] %s556
          %562 = dma.vmem_to_hbm [thread:$0]  %s557, 256, %s555, [#allocation5], 128, 128, 8
        $region68: #{tpu_custom_call.1} parent=47 // pred_fallthru
          _
        // Predicated region
        $region69: #{tpu_custom_call.1} parent=47 // pred_check
          %p563 = pneg %p203
        $region70: #{tpu_custom_call.1} parent=47 // pred_check_branch
          %565 = sbr.rel (%p563) target = $region72
        $region71: #{tpu_custom_call.1} parent=47 // pred_region
          %566 = dma.done [#allocation5], 256
        $region72: #{tpu_custom_call.1} parent=47 // pred_fallthru
          _
      $region48: #{tpu_custom_call.1} parent=5 // pred_fallthru
        _
      %p567 = scmp.le.s32.totalorder 2, %s16
      // Predicated region
      $region73: #{tpu_custom_call.1} parent=5 // pred_check
        %p568 = pneg %p567
      $region74: #{tpu_custom_call.1} parent=5 // pred_check_branch
        %570 = sbr.rel (%p568) target = $region76
      $region75: #{tpu_custom_call.1} parent=5 // pred_region
        %s571 = ssub.s32 %s16, 2
      $region76: #{tpu_custom_call.1} parent=5 // pred_fallthru
        _
    $region6: #{tpu_custom_call.1} parent=1 // loop_footer
      %s20 = sadd.s32 1, %s16
    $region7: #{tpu_custom_call.1} parent=1 // loop_footer_branch
      %15 = sbr.rel target = $region3
    $region8: #{tpu_custom_call.1} parent=1 // loop_exit
      _
    %572 = vsyncpa [#allocation4], 1
    %s573 = scalar_lea.sflag [#allocation4], 1
    %574 = vsyncpa %s573, 1
    %575 = vsyncpa [#allocation7], 1
    %576 = vsyncpa [#allocation5], 1
    %s577 = scalar_lea.sflag [#allocation5], 1
    %578 = vsyncpa %s577, 1

</llo_original>
